<compile_context>
chip_gen: v5e
topology: v5e:2x2
jax: 0.10.0
libtpu: 0.0.40
codegen_flags: <defaults>
</compile_context>

<pallas_src>
import jax
import jax.numpy as jnp
from jax.experimental import pallas as pl
from jax.experimental.pallas import tpu as pltpu

LN_EPS = 1e-5


def effn_kernel(
    x_ref,      # (TM, P)  f32 input rows
    w_ref,      # (P, P)   bf16 FFN weight
    b_ref,      # (1, P)   f32 FFN bias
    ln_g_ref,   # (1, P)   f32 LayerNorm gamma
    ln_b_ref,   # (1, P)   f32 LayerNorm beta
    o_ref,      # (TM, P)  f32 output rows
):
    x = x_ref[...]                                   # (TM, P) f32

    # --- ffn: Linear(projection_dim -> projection_dim), bf16 MXU, f32 acc ---
    h = jnp.dot(x.astype(jnp.bfloat16), w_ref[...],
                preferred_element_type=jnp.float32)
    h = h + b_ref[...]

    # --- ReluSIG activation (f32 elementwise; sigmoid goes to the EUP) ---
    # TODO(synk): ReluSIG is not defined in the reference source; assuming
    # relu(x) * sigmoid(x).
    h = jnp.maximum(h, 0.0) * jax.nn.sigmoid(h)

    # --- dropout(p=0.01) is identity at inference; residual add ---
    # TODO(synk): training-mode RNG dropout not implemented (inference path).
    res = x + h

    # --- LayerNorm(projection_dim), biased variance, eps=1e-5 (f32) ---
    mean = jnp.mean(res, axis=-1, keepdims=True)
    var = jnp.mean((res - mean) ** 2, axis=-1, keepdims=True)
    normed = (res - mean) * jax.lax.rsqrt(var + LN_EPS)
    o_ref[...] = (normed * ln_g_ref[...] + ln_b_ref[...]).astype(o_ref.dtype)


def effn(x, params, *, max_block_rows=512):
    """x: (B, S, P) f32 -> (B, S, P) f32."""
    B, S, P = x.shape
    M = B * S
    x2 = x.reshape(M, P)

    # Row-block size: full slab when small, otherwise tiles of up to
    # `max_block_rows` rows (multiple of 8; partial last block is masked).
    block_m = M if M <= max_block_rows else max_block_rows
    grid = (pl.cdiv(M, block_m),)

    out = pl.pallas_call(
        effn_kernel,
        out_shape=jax.ShapeDtypeStruct((M, P), jnp.float32),
        grid_spec=pltpu.PrefetchScalarGridSpec(
            num_scalar_prefetch=0,
            grid=grid,
            in_specs=[
                pl.BlockSpec((block_m, P), lambda i: (i, 0)),   # x rows
                pl.BlockSpec((P, P), lambda i: (0, 0)),         # W (resident)
                pl.BlockSpec((1, P), lambda i: (0, 0)),         # b
                pl.BlockSpec((1, P), lambda i: (0, 0)),         # ln gamma
                pl.BlockSpec((1, P), lambda i: (0, 0)),         # ln beta
            ],
            out_specs=pl.BlockSpec((block_m, P), lambda i: (i, 0)),
        ),
        compiler_params=pltpu.CompilerParams(
            dimension_semantics=("parallel",)),
    )(x2, params["w_ffn"], params["b_ffn"], params["ln_g"], params["ln_b"])

    return out.reshape(B, S, P)


def init_params(key, projection_dim):
    P = projection_dim
    kw, kb = jax.random.split(key)
    return {
        # Weight stored in bf16 for the MXU path; everything else f32.
        "w_ffn": (jax.random.normal(kw, (P, P), jnp.float32) * 0.05
                  ).astype(jnp.bfloat16),
        "b_ffn": jax.random.normal(kb, (1, P), jnp.float32) * 0.05,
        "ln_g": jnp.ones((1, P), jnp.float32),
        "ln_b": jnp.zeros((1, P), jnp.float32),
    }


def effn_ref(x, params):
    """Pure-JAX reference (f32 math on the same bf16-stored weights)."""
    w = params["w_ffn"].astype(jnp.float32)
    h = x @ w + params["b_ffn"]
    h = jnp.maximum(h, 0.0) * jax.nn.sigmoid(h)
    res = x + h
    mean = jnp.mean(res, axis=-1, keepdims=True)
    var = jnp.mean((res - mean) ** 2, axis=-1, keepdims=True)
    normed = (res - mean) * jax.lax.rsqrt(var + LN_EPS)
    return normed * params["ln_g"] + params["ln_b"]


if __name__ == "__main__":
    B, S = 2, 8
    projection_dim = 32

    key = jax.random.PRNGKey(0)
    kx, kp = jax.random.split(key)
    x = jax.random.normal(kx, (B, S, projection_dim), jnp.float32)
    params = init_params(kp, projection_dim)

    out = effn(x, params)
    out = jax.block_until_ready(out)

    assert out.shape == (B, S, projection_dim)
    assert bool(jnp.all(jnp.isfinite(out)))

    ref = effn_ref(x, params)
    max_err = float(jnp.max(jnp.abs(out - ref)))
    assert max_err < 5e-2, f"mismatch vs reference: {max_err}"

    print("KERNEL_OK")
</pallas_src>

<mosaic_0001>
module attributes {stable_mosaic.version = 11 : i64} {
  func.func @effn_kernel(%arg0: i32, %arg1: memref<16x32xf32, #tpu.memory_space<vmem>>, %arg2: memref<32x32xbf16, #tpu.memory_space<vmem>>, %arg3: memref<1x32xf32, #tpu.memory_space<vmem>>, %arg4: memref<1x32xf32, #tpu.memory_space<vmem>>, %arg5: memref<1x32xf32, #tpu.memory_space<vmem>>, %arg6: memref<16x32xf32, #tpu.memory_space<vmem>>) attributes {dimension_semantics = [#tpu.dimension_semantics<parallel>], iteration_bounds = array<i64: 1>, scalar_prefetch = 0 : i64, scratch_operands = 0 : i64, tpu.core_type = #tpu.core_type<tc>, window_params = [{transform_indices = @transform_0, window_bounds = array<i64: 16, 32>}, {pipeline_mode = #tpu.pipeline_mode<synchronous>, transform_indices = @transform_1, window_bounds = array<i64: 32, 32>}, {pipeline_mode = #tpu.pipeline_mode<synchronous>, transform_indices = @transform_2, window_bounds = array<i64: 1, 32>}, {pipeline_mode = #tpu.pipeline_mode<synchronous>, transform_indices = @transform_3, window_bounds = array<i64: 1, 32>}, {pipeline_mode = #tpu.pipeline_mode<synchronous>, transform_indices = @transform_4, window_bounds = array<i64: 1, 32>}, {transform_indices = @transform_5, window_bounds = array<i64: 16, 32>}]} {
    %c0 = arith.constant 0 : index
    %c0_0 = arith.constant 0 : index
    %0 = vector.load %arg1[%c0, %c0_0] : memref<16x32xf32, #tpu.memory_space<vmem>>, vector<16x32xf32>
    %1 = arith.truncf %0 : vector<16x32xf32> to vector<16x32xbf16>
    %c0_1 = arith.constant 0 : index
    %c0_2 = arith.constant 0 : index
    %2 = vector.load %arg2[%c0_1, %c0_2] : memref<32x32xbf16, #tpu.memory_space<vmem>>, vector<32x32xbf16>
    %cst = arith.constant dense<0.000000e+00> : vector<16x32xf32>
    %3 = tpu.matmul %1, %2, %cst {dimension_numbers = #tpu.dot_dimension_numbers<[1], [0], [0], [1], [0, 0, 1, 1], [], []>} : vector<16x32xbf16>, vector<32x32xbf16>, vector<16x32xf32> -> vector<16x32xf32>
    %c0_3 = arith.constant 0 : index
    %c0_4 = arith.constant 0 : index
    %4 = vector.load %arg3[%c0_3, %c0_4] : memref<1x32xf32, #tpu.memory_space<vmem>>, vector<1x32xf32>
    %5 = vector.broadcast %4 : vector<1x32xf32> to vector<16x32xf32>
    %6 = arith.addf %3, %5 : vector<16x32xf32>
    %cst_5 = arith.constant 0.000000e+00 : f32
    %7 = vector.broadcast %cst_5 : f32 to vector<16x32xf32>
    %8 = arith.maximumf %6, %7 : vector<16x32xf32>
    %9 = arith.negf %6 : vector<16x32xf32>
    %10 = math.exp %9 : vector<16x32xf32>
    %cst_6 = arith.constant 1.000000e+00 : f32
    %11 = vector.broadcast %cst_6 : f32 to vector<16x32xf32>
    %12 = arith.addf %11, %10 : vector<16x32xf32>
    %13 = arith.divf %11, %12 : vector<16x32xf32>
    %14 = arith.mulf %8, %13 : vector<16x32xf32>
    %15 = arith.addf %0, %14 : vector<16x32xf32>
    %cst_7 = arith.constant dense<0.000000e+00> : vector<16xf32>
    %16 = vector.multi_reduction <add>, %15, %cst_7 [1] : vector<16x32xf32> to vector<16xf32>
    %17 = vector.shape_cast %16 : vector<16xf32> to vector<16x1xf32>
    %cst_8 = arith.constant 3.200000e+01 : f32
    %18 = vector.broadcast %cst_8 : f32 to vector<16x1xf32>
    %19 = arith.divf %17, %18 : vector<16x1xf32>
    %20 = vector.broadcast %19 : vector<16x1xf32> to vector<16x32xf32>
    %21 = arith.subf %15, %20 : vector<16x32xf32>
    %22 = arith.mulf %21, %21 : vector<16x32xf32>
    %cst_9 = arith.constant dense<0.000000e+00> : vector<16xf32>
    %23 = vector.multi_reduction <add>, %22, %cst_9 [1] : vector<16x32xf32> to vector<16xf32>
    %24 = vector.shape_cast %23 : vector<16xf32> to vector<16x1xf32>
    %cst_10 = arith.constant 3.200000e+01 : f32
    %25 = vector.broadcast %cst_10 : f32 to vector<16x1xf32>
    %26 = arith.divf %24, %25 : vector<16x1xf32>
    %27 = vector.broadcast %19 : vector<16x1xf32> to vector<16x32xf32>
    %28 = arith.subf %15, %27 : vector<16x32xf32>
    %cst_11 = arith.constant 9.99999974E-6 : f32
    %29 = vector.broadcast %cst_11 : f32 to vector<16x1xf32>
    %30 = arith.addf %26, %29 : vector<16x1xf32>
    %31 = math.rsqrt %30 : vector<16x1xf32>
    %32 = vector.broadcast %31 : vector<16x1xf32> to vector<16x32xf32>
    %33 = arith.mulf %28, %32 : vector<16x32xf32>
    %c0_12 = arith.constant 0 : index
    %c0_13 = arith.constant 0 : index
    %34 = vector.load %arg4[%c0_12, %c0_13] : memref<1x32xf32, #tpu.memory_space<vmem>>, vector<1x32xf32>
    %35 = vector.broadcast %34 : vector<1x32xf32> to vector<16x32xf32>
    %36 = arith.mulf %33, %35 : vector<16x32xf32>
    %c0_14 = arith.constant 0 : index
    %c0_15 = arith.constant 0 : index
    %37 = vector.load %arg5[%c0_14, %c0_15] : memref<1x32xf32, #tpu.memory_space<vmem>>, vector<1x32xf32>
    %38 = vector.broadcast %37 : vector<1x32xf32> to vector<16x32xf32>
    %39 = arith.addf %36, %38 : vector<16x32xf32>
    %c0_16 = arith.constant 0 : index
    %c0_17 = arith.constant 0 : index
    %40 = vector.load %arg6[%c0_16, %c0_17] : memref<16x32xf32, #tpu.memory_space<vmem>>, vector<16x32xf32>
    tpu.vector_store %arg6[%c0_16, %c0_17], %39 {strides = array<i32>} : memref<16x32xf32, #tpu.memory_space<vmem>>, vector<16x32xf32>,
    return
  }
  func.func @transform_0(%arg0: i32) -> (i32, i32) {
    %c0_i32 = arith.constant 0 : i32
    %c0_i32_0 = arith.constant 0 : i32
    return %arg0, %c0_i32 : i32, i32
  }
  func.func @transform_1(%arg0: i32) -> (i32, i32) {
    %c0_i32 = arith.constant 0 : i32
    %c0_i32_0 = arith.constant 0 : i32
    %c0_i32_1 = arith.constant 0 : i32
    return %c0_i32, %c0_i32_0 : i32, i32
  }
  func.func @transform_2(%arg0: i32) -> (i32, i32) {
    %c0_i32 = arith.constant 0 : i32
    %c0_i32_0 = arith.constant 0 : i32
    %c0_i32_1 = arith.constant 0 : i32
    return %c0_i32, %c0_i32_0 : i32, i32
  }
  func.func @transform_3(%arg0: i32) -> (i32, i32) {
    %c0_i32 = arith.constant 0 : i32
    %c0_i32_0 = arith.constant 0 : i32
    %c0_i32_1 = arith.constant 0 : i32
    return %c0_i32, %c0_i32_0 : i32, i32
  }
  func.func @transform_4(%arg0: i32) -> (i32, i32) {
    %c0_i32 = arith.constant 0 : i32
    %c0_i32_0 = arith.constant 0 : i32
    %c0_i32_1 = arith.constant 0 : i32
    return %c0_i32, %c0_i32_0 : i32, i32
  }
  func.func @transform_5(%arg0: i32) -> (i32, i32) {
    %c0_i32 = arith.constant 0 : i32
    %c0_i32_0 = arith.constant 0 : i32
    return %arg0, %c0_i32 : i32, i32
  }
}

</mosaic_0001>

<llo_original>
// kernel: tpu_custom_call.1
$region0: #{tpu_custom_call.1}
  #allocation0 [shape = 'u32[]', space=smem, size = 0x4, offset = 0x4, fixed_abs, tag = 'smem constant byte address 0x4 - core index']
  #allocation1 [shape = 'u32[72,128]{1,0:T(1,128)}', space=vmem, size = 0x9000, scoped, tag = 'internal scratch']
  %s0 = inlined_call_operand.hbm [shape: f32[16,32], index: 0, kind: input, shape index: {}]
  %s1 = inlined_call_operand.hbm [shape: bf16[32,32], index: 1, kind: input, shape index: {}]
  %s2 = inlined_call_operand.vmem [shape: f32[1,32], index: 2, kind: input, shape index: {}]
  %s3 = inlined_call_operand.vmem [shape: f32[1,32], index: 3, kind: input, shape index: {}]
  %s4 = inlined_call_operand.vmem [shape: f32[1,32], index: 4, kind: input, shape index: {}]
  %s5 = inlined_call_operand.hbm [shape: f32[16,32], index: 5, kind: output, shape index: {}]
  %s6 = sld [smem:[#allocation0]]
  $region38: #{tpu_custom_call.1} parent=0
    _
  %s8 = ssub.s32 1, %s6
  %s9 = scalar_select 0, %s8, %s6
  $region1: #{tpu_custom_call.1} parent=0
    #allocation2 [shape = 'u8[8192]{0}', space=vmem, size = 0x2000, scoped, tag = 'input window, operand 0, single buffered']
    #allocation3 [shape = 's32[1]{0}', space=sflag, size = 0x4, scoped, tag = 'scoped memory for tpu_custom_call.1']
    #allocation4 [shape = 's32[1]{0}', space=sflag, size = 0x4, scoped, tag = 'scoped memory for tpu_custom_call.1']
    #allocation5 [shape = 'u8[8192]{0}', space=vmem, size = 0x2000, scoped, tag = 'input window, operand 1, single buffered']
    #allocation6 [shape = 's32[1]{0}', space=sflag, size = 0x4, scoped, tag = 'scoped memory for tpu_custom_call.1']
    #allocation7 [shape = 'u8[8192]{0}', space=vmem, size = 0x2000, scoped, tag = 'output window, operand 0, single buffered']
    %10 = vsyncpa [#allocation3], 0
    %11 = vsyncpa [#allocation6], 0
    %12 = vsyncpa [#allocation4], 0
    // Predicated region
    $region2: #{tpu_custom_call.1} parent=1 // pred_check
      _
    $region3: #{tpu_custom_call.1} parent=1 // pred_check_branch
      %14 = sbr.rel (0) target = $region5
    $region4: #{tpu_custom_call.1} parent=1 // pred_region
      %16 = vsyncadd [#allocation3], 0
      %s17 = sshll.u32 %s0, 4
      %s18 = int_to_ptr.hbm [resolvable:$true] %s17
      %s19 = sshll.u32 [#allocation2], 4
      %s20 = int_to_ptr.vmem [resolvable:$true] %s19
      %25 = dma.hbm_to_vmem [thread:$0]  %s18, 256, %s20, [#allocation3], 128, 128, 8
    $region5: #{tpu_custom_call.1} parent=1 // pred_fallthru
      _
    // Predicated region
    $region6: #{tpu_custom_call.1} parent=1 // pred_check
      _
    $region7: #{tpu_custom_call.1} parent=1 // pred_check_branch
      %27 = sbr.rel (0) target = $region9
    $region8: #{tpu_custom_call.1} parent=1 // pred_region
      %29 = vsyncadd [#allocation6], 0
      %s30 = sshll.u32 %s1, 4
      %s31 = int_to_ptr.hbm [resolvable:$true] %s30
      %s32 = sshll.u32 [#allocation5], 4
      %s33 = int_to_ptr.vmem [resolvable:$true] %s32
      %38 = dma.hbm_to_vmem [thread:$0]  %s31, 256, %s33, [#allocation6], 64, 64, 4
    $region9: #{tpu_custom_call.1} parent=1 // pred_fallthru
      _
    // Predicated region
    $region10: #{tpu_custom_call.1} parent=1 // pred_check
      _
    $region11: #{tpu_custom_call.1} parent=1 // pred_check_branch
      %40 = sbr.rel (0) target = $region13
    $region12: #{tpu_custom_call.1} parent=1 // pred_region
      _
    $region13: #{tpu_custom_call.1} parent=1 // pred_fallthru
      _
    // Predicated region
    $region14: #{tpu_custom_call.1} parent=1 // pred_check
      _
    $region15: #{tpu_custom_call.1} parent=1 // pred_check_branch
      %42 = sbr.rel (0) target = $region17
    $region16: #{tpu_custom_call.1} parent=1 // pred_region
      _
    $region17: #{tpu_custom_call.1} parent=1 // pred_fallthru
      _
    // Predicated region
    $region18: #{tpu_custom_call.1} parent=1 // pred_check
      _
    $region19: #{tpu_custom_call.1} parent=1 // pred_check_branch
      %44 = sbr.rel (0) target = $region21
    $region20: #{tpu_custom_call.1} parent=1 // pred_region
      _
    $region21: #{tpu_custom_call.1} parent=1 // pred_fallthru
      _
    // Predicated region
    $region22: #{tpu_custom_call.1} parent=1 // pred_check
      _
    $region23: #{tpu_custom_call.1} parent=1 // pred_check_branch
      %46 = sbr.rel (0) target = $region25
    $region24: #{tpu_custom_call.1} parent=1 // pred_region
      %48 = dma.done [#allocation3], 256
    $region25: #{tpu_custom_call.1} parent=1 // pred_fallthru
      _
    // Predicated region
    $region26: #{tpu_custom_call.1} parent=1 // pred_check
      _
    $region27: #{tpu_custom_call.1} parent=1 // pred_check_branch
      %50 = sbr.rel (0) target = $region29
    $region28: #{tpu_custom_call.1} parent=1 // pred_region
      %52 = dma.done [#allocation6], 256
    $region29: #{tpu_custom_call.1} parent=1 // pred_fallthru
      _
    %v54 = vld [vmem:[#allocation2] sm:$0xff]
    %v55 = vld [vmem:[#allocation2 + $0x8] sm:$0xff]
    %v56 = vpack.c.bf16 %v55, %v54
    %v57 = vld [vmem:[#allocation5] sm:$0xf]
    %v58 = vld [vmem:[#allocation5 + $0x4] sm:$0xf]
    %v59 = vld [vmem:[#allocation5 + $0x8] sm:$0xf]
    %v60 = vld [vmem:[#allocation5 + $0xc] sm:$0xf]
    %v61 = vld [vmem:[%s2] sm:$0x1]
    %v63 = vperm.slane %v61, 0
    %v69 = vunpack.c.l.b16 %v57
    %v70 = vunpack.c.l.b16 %v58
    %v71 = vunpack.c.l.b16 %v59
    %v72 = vunpack.c.l.b16 %v60
    %v73 = vpack.c.b16 %v70, %v69
    %v74 = vpack.c.b16 %v72, %v71
    %vm77 = vcmask 261120
    %v79 = vsel %vm77, %v56, 0
    %81 = vmatpush.bf16.msra.mxu0 0
    %82 = vmatpush.bf16.msra.mxu0 0
    %83 = vmatpush.bf16.msra.mxu0 0
    %84 = vmatpush.bf16.msra.mxu0 0
    %85 = vmatpush.bf16.msra.mxu0 0
    %86 = vmatpush.bf16.msra.mxu0 0
    %87 = vmatpush.bf16.msra.mxu0 %v74
    %88 = vmatpush.bf16.msra.mxu0 %v73
    %89 = vmatmul.bf16.gmra.mxu0 %v79
    %v90 = vpop.f32.mrf.mxu0
    %v91 = vadd.f32 %v63, %v90
    %v92 = vpop.f32.mrf.mxu0
    %v93 = vadd.f32 %v63, %v92
    %94 = vdwg.mxu0
    %v95 = vmax.f32 %v91, 0.0
    %v96 = vmax.f32 %v93, 0.0
    %v97 = vxor.u32 %v91, 2147483648
    %v98 = vxor.u32 %v93, 2147483648
    %v99 = vmul.f32 %v97, 1.442695
    %v100 = vpow.pop %v99
    %v101 = vmul.f32 %v98, 1.442695
    %v102 = vpow.pop %v101
    %v103 = vadd.f32 %v100, 1.0
    %v104 = vadd.f32 %v102, 1.0
    %v105 = vrcp.pop %v103
    %v106 = vmul.f32 %v103, %v105
    %v107 = vsub.f32 1.0, %v106
    %v108 = vmul.f32 %v105, %v107
    %v109 = vadd.f32 %v105, %v108
    %vm110 = vweird.f32 %v103
    %vm111 = vweird.f32 %v105
    %vm112 = vmor %vm110, %vm111
    %v113 = vsel %vm112, %v105, %v109
    %v114 = vand.u32 2147483647, %v103
    %vm115 = vcmp.eq.f32.partialorder %v114, 8.507059e+37
    %v116 = vand.u32 %v103, 2147483648
    %v117 = vor.u32 1.1754944e-38, %v116
    %v118 = vsel %vm115, %v117, %v113
    %v119 = vmul.f32 1.0, %v118
    %v120 = vrcp.pop %v104
    %v121 = vmul.f32 %v104, %v120
    %v122 = vsub.f32 1.0, %v121
    %v123 = vmul.f32 %v120, %v122
    %v124 = vadd.f32 %v120, %v123
    %vm125 = vweird.f32 %v104
    %vm126 = vweird.f32 %v120
    %vm127 = vmor %vm125, %vm126
    %v128 = vsel %vm127, %v120, %v124
    %v129 = vand.u32 2147483647, %v104
    %vm130 = vcmp.eq.f32.partialorder %v129, 8.507059e+37
    %v131 = vand.u32 %v104, 2147483648
    %v132 = vor.u32 1.1754944e-38, %v131
    %v133 = vsel %vm130, %v132, %v128
    %v134 = vmul.f32 1.0, %v133
    %v135 = vmul.f32 %v95, %v119
    %v136 = vmul.f32 %v96, %v134
    %v137 = vadd.f32 %v54, %v135
    %v138 = vadd.f32 %v55, %v136
    %v139 = vsel %vm77, %v137, 0.0
    %140 = vadd.xlane.f32.xlu0 %v139
    %v141 = vpop.xlane.xlu0 %140
    %v142 = vsel %vm77, %v138, 0.0
    %143 = vadd.xlane.f32.xlu0 %v142
    %v144 = vpop.xlane.xlu0 %143
    %v145 = vrcp.pop 32.0
    %v146 = vmul.f32 32.0, %v145
    %v147 = vsub.f32 1.0, %v146
    %v148 = vmul.f32 %v145, %v147
    %v149 = vadd.f32 %v145, %v148
    %vm150 = vweird.f32 %v145
    %v151 = vsel %vm150, %v145, %v149
    %v152 = vmul.f32 %v141, %v151
    %v153 = vmul.f32 %v144, %v151
    %v154 = vsub.f32 %v137, %v152
    %v155 = vsub.f32 %v138, %v153
    %v156 = vmul.f32 %v154, %v154
    %v157 = vmul.f32 %v155, %v155
    %v158 = vsel %vm77, %v156, 0.0
    %159 = vadd.xlane.f32.xlu0 %v158
    %v160 = vpop.xlane.xlu0 %159
    %v161 = vsel %vm77, %v157, 0.0
    %162 = vadd.xlane.f32.xlu0 %v161
    %v163 = vpop.xlane.xlu0 %162
    %v164 = vmul.f32 %v160, %v151
    %v165 = vmul.f32 %v163, %v151
    %v166 = vadd.f32 %v164, 1e-05
    %v167 = vadd.f32 %v165, 1e-05
    %v168 = vrsqrt.pop %v166
    %v169 = vmul.f32 %v168, %v166
    %v170 = vmul.f32 %v169, %v168
    %v171 = vmul.f32 0.5, %v170
    %v172 = vsub.f32 1.5, %v171
    %v173 = vmul.f32 %v168, %v172
    %vm174 = vweird.f32 %v166
    %vm175 = vweird.f32 %v168
    %vm176 = vmor %vm174, %vm175
    %v177 = vsel %vm176, %v168, %v173
    %v178 = vrsqrt.pop %v167
    %v179 = vmul.f32 %v178, %v167
    %v180 = vmul.f32 %v179, %v178
    %v181 = vmul.f32 0.5, %v180
    %v182 = vsub.f32 1.5, %v181
    %v183 = vmul.f32 %v178, %v182
    %vm184 = vweird.f32 %v167
    %vm185 = vweird.f32 %v178
    %vm186 = vmor %vm184, %vm185
    %v187 = vsel %vm186, %v178, %v183
    %v188 = vmul.f32 %v154, %v177
    %v189 = vmul.f32 %v155, %v187
    %v190 = vld [vmem:[%s3] sm:$0x1]
    %v192 = vperm.slane %v190, 0
    %v194 = vmul.f32 %v188, %v192
    %v195 = vmul.f32 %v189, %v192
    %v196 = vld [vmem:[%s4] sm:$0x1]
    %v198 = vperm.slane %v196, 0
    %v200 = vadd.f32 %v194, %v198
    %v201 = vadd.f32 %v195, %v198
    %202 = vst.msk [vmem:[#allocation7] sm:$0xff] %vm77, %v200
    %203 = vst.msk [vmem:[#allocation7 + $0x8] sm:$0xff] %vm77, %v201
    // Predicated region
    $region30: #{tpu_custom_call.1} parent=1 // pred_check
      _
    $region31: #{tpu_custom_call.1} parent=1 // pred_check_branch
      %205 = sbr.rel (0) target = $region33
    $region32: #{tpu_custom_call.1} parent=1 // pred_region
      %207 = vsyncadd [#allocation4], 0
      %s208 = sshll.u32 [#allocation7], 4
      %s209 = int_to_ptr.vmem [resolvable:$true] %s208
      %s210 = sshll.u32 %s5, 4
      %s211 = int_to_ptr.hbm [resolvable:$true] %s210
      %216 = dma.vmem_to_hbm [thread:$0]  %s209, 256, %s211, [#allocation4], 128, 128, 8
    $region33: #{tpu_custom_call.1} parent=1 // pred_fallthru
      _
    // Predicated region
    $region34: #{tpu_custom_call.1} parent=1 // pred_check
      _
    $region35: #{tpu_custom_call.1} parent=1 // pred_check_branch
      %218 = sbr.rel (0) target = $region37
    $region36: #{tpu_custom_call.1} parent=1 // pred_region
      %220 = dma.done [#allocation4], 256
    $region37: #{tpu_custom_call.1} parent=1 // pred_fallthru
      _
    %221 = vsyncpa [#allocation3], 1
    %222 = vsyncpa [#allocation6], 1
    %223 = vsyncpa [#allocation4], 1

</llo_original>
